<compile_context>
chip_gen: v5e
topology: v5e:2x2
jax: 0.10.0
libtpu: 0.0.40
codegen_flags: <defaults>
</compile_context>

<pallas_src>
import jax
import jax.numpy as jnp
from jax.experimental import pallas as pl
from jax.experimental.pallas import tpu as pltpu

NUM_CLASSES = 2


def _cdiv(a, b):
    return -(-a // b)


def _round_up(x, m):
    return _cdiv(x, m) * m


def rerank_kernel(x_ref, w_ref, bd_ref, out_ref):
    # x_ref  : [TG, P*H]  pooled encoder features, group-major (native dtype)
    # w_ref  : [P*H, P]   block-diagonal collapsed head (w[:,0]-w[:,1] blocks)
    # bd_ref : [1, 1]     f32, b[0] - b[1]
    # out_ref: [TG, P]    f32 per-passage log-probs (log_softmax over passages)

    # H-contraction on the MXU -> lane-dense [TG, P] result; no [TG,P,H]
    # f32 temporary ever hits VMEM.
    d = jnp.dot(x_ref[...], w_ref[...], preferred_element_type=jnp.float32)
    d = d + bd_ref[...]                                   # logits0 - logits1

    # log_softmax(logits, -1)[:, 1] == -softplus(logits0 - logits1)
    score = -(jnp.maximum(d, 0.0) + jnp.log(1.0 + jnp.exp(-jnp.abs(d))))

    # log_softmax over the passage (lane) axis.
    m = jnp.max(score, axis=-1, keepdims=True)
    lse = m + jnp.log(jnp.sum(jnp.exp(score - m), axis=-1, keepdims=True))
    out_ref[...] = (score - lse).astype(out_ref.dtype)


def _choose_tiling(groups, row_bytes, budget_bytes):
    """Pick (group_tile, padded_groups, num_blocks)."""
    budget_rows = max(1, budget_bytes // row_bytes)
    # Aim for >= 2 blocks (v7x megacore) and more if one tile would blow the
    # per-buffer VMEM budget.
    nb = max(2, _cdiv(groups, budget_rows))
    tg = _round_up(_cdiv(groups, nb), 8)
    padded = nb * tg
    if groups <= budget_rows and (padded - groups) * 4 > groups:
        # Small problem: splitting would mostly process zero padding.  Use a
        # single full-extent block (no 8-row alignment needed in that case).
        return groups, groups, 1
    return tg, padded, nb


def rerank_forward(x, w, b, passages, vmem_budget_bytes=12 * 1024 * 1024):
    """Pallas implementation of Rerank.forward.

    x: [B*P, H] pooled encoder features (any float dtype; bf16 streamed as-is)
    w: [H, 2], b: [2] or [1, 2] classification head parameters
    Returns (None, logprobs) with logprobs [B, P] float32.
    """
    n, hidden = x.shape
    assert n % passages == 0, "rows must be a multiple of `passages`"
    groups = n // passages
    k = passages * hidden

    # Collapse the 2-class head once (outside the grid loop).
    w32 = jnp.asarray(w, jnp.float32)
    b32 = jnp.asarray(b, jnp.float32).reshape(-1)
    w_diff = w32[:, 0] - w32[:, 1]                                   # [H]
    # Block-diagonal weight so one 2-D MXU matmul yields the lane-dense
    # [TG, P] score matrix directly.  Footprint is P*H*P*itemsize (fine for
    # typical rerank passage counts).
    w_big = jnp.kron(jnp.eye(passages, dtype=jnp.float32),
                     w_diff.reshape(hidden, 1)).astype(x.dtype)      # [P*H, P]
    b_diff = (b32[0] - b32[1]).reshape(1, 1)                         # [1, 1]

    # Group-major 2-D view of x (free: rows are already contiguous in HBM).
    x2 = x.reshape(groups, k)

    itemsize = jnp.dtype(x.dtype).itemsize
    tg, padded, nb = _choose_tiling(groups, k * itemsize, vmem_budget_bytes)
    if padded != groups:
        x2 = jnp.pad(x2, ((0, padded - groups), (0, 0)))

    # VMEM accounting (double-buffered operands + small temporaries) so the
    # scoped default (16/32 MiB) never silently caps the tile size.
    def tile_bytes(rows, cols, size):
        return _round_up(max(rows, 1), 16) * _round_up(max(cols, 1), 128) * size

    vmem_need = (2 * tile_bytes(tg, k, itemsize)                 # x (2 bufs)
                 + 2 * tile_bytes(k, passages, itemsize)         # w_big
                 + 2 * tile_bytes(tg, passages, 4)               # out (2 bufs)
                 + 6 * tile_bytes(tg, passages, 4)               # d/score temps
                 + 2 * tile_bytes(1, 1, 4))                      # b_diff
    vmem_limit = min(max(int(vmem_need * 1.5) + (2 << 20), 16 << 20), 100 << 20)

    out = pl.pallas_call(
        rerank_kernel,
        out_shape=jax.ShapeDtypeStruct((padded, passages), jnp.float32),
        grid_spec=pltpu.PrefetchScalarGridSpec(
            num_scalar_prefetch=0,
            grid=(nb,),
            in_specs=[
                # big streaming feature tile; last dim == full dim (P*H)
                pl.BlockSpec((tg, k), lambda g: (g, 0)),
                # constant head operands stay resident (index_map -> (0, 0))
                pl.BlockSpec((k, passages), lambda g: (0, 0)),
                pl.BlockSpec((1, 1), lambda g: (0, 0)),
            ],
            out_specs=pl.BlockSpec((tg, passages), lambda g: (g, 0)),
        ),
        compiler_params=pltpu.CompilerParams(
            dimension_semantics=("parallel",),
            vmem_limit_bytes=vmem_limit),
    )(x2, w_big, b_diff)

    logprobs = out[:groups] if padded != groups else out       # [B, P] f32
    return (None, logprobs)


def rerank_reference(x, w, b, passages):
    logits = (jnp.dot(x.astype(jnp.float32), jnp.asarray(w, jnp.float32))
              + jnp.asarray(b, jnp.float32).reshape(1, -1))
    s = jax.nn.log_softmax(logits, axis=-1)[:, 1]
    s = s.reshape(-1, passages)
    return jax.nn.log_softmax(s, axis=-1)


if __name__ == "__main__":
    # small shapes: 20 queries x 8 passages each, hidden=32, 2 classes
    groups, passages, hidden = 20, 8, 32
    key = jax.random.PRNGKey(0)
    kx, kw, kb = jax.random.split(key, 3)

    x = jax.random.normal(kx, (groups * passages, hidden), dtype=jnp.float32)
    w = jax.random.normal(kw, (hidden, NUM_CLASSES), dtype=jnp.float32) * 0.1
    b = jax.random.normal(kb, (1, NUM_CLASSES), dtype=jnp.float32) * 0.1
    # Snap matmul operands to bf16-representable values so the comparison vs
    # the f32 XLA reference is insensitive to MXU matmul precision.
    x = x.astype(jnp.bfloat16).astype(jnp.float32)
    w = w.astype(jnp.bfloat16).astype(jnp.float32)

    ref = rerank_reference(x, w, b, passages)

    # (a) default budget: single resident block
    _, lp_single = rerank_forward(x, w, b, passages)
    # (b) tiny budget: forces the padded multi-block pipelined path
    _, lp_multi = rerank_forward(
        x, w, b, passages, vmem_budget_bytes=8 * passages * hidden * 4)
    lp_single, lp_multi = jax.block_until_ready((lp_single, lp_multi))

    assert lp_single.shape == (groups, passages)
    assert lp_multi.shape == (groups, passages)
    assert jnp.allclose(lp_single, ref, atol=1e-4), "single-block mismatch"
    assert jnp.allclose(lp_multi, ref, atol=1e-4), "multi-block mismatch"

    print("KERNEL_OK")
</pallas_src>

<mosaic_0001>
module attributes {stable_mosaic.version = 11 : i64} {
  func.func @rerank_kernel(%arg0: i32, %arg1: memref<20x256xf32, #tpu.memory_space<vmem>>, %arg2: memref<256x8xf32, #tpu.memory_space<vmem>>, %arg3: memref<1x1xf32, #tpu.memory_space<vmem>>, %arg4: memref<20x8xf32, #tpu.memory_space<vmem>>) attributes {dimension_semantics = [#tpu.dimension_semantics<parallel>], iteration_bounds = array<i64: 1>, scalar_prefetch = 0 : i64, scratch_operands = 0 : i64, tpu.core_type = #tpu.core_type<tc>, window_params = [{transform_indices = @transform_0, window_bounds = array<i64: 20, 256>}, {pipeline_mode = #tpu.pipeline_mode<synchronous>, transform_indices = @transform_1, window_bounds = array<i64: 256, 8>}, {pipeline_mode = #tpu.pipeline_mode<synchronous>, transform_indices = @transform_2, window_bounds = array<i64: 1, 1>}, {transform_indices = @transform_3, window_bounds = array<i64: 20, 8>}]} {
    %c0 = arith.constant 0 : index
    %c0_0 = arith.constant 0 : index
    %0 = vector.load %arg1[%c0, %c0_0] : memref<20x256xf32, #tpu.memory_space<vmem>>, vector<20x256xf32>
    %c0_1 = arith.constant 0 : index
    %c0_2 = arith.constant 0 : index
    %1 = vector.load %arg2[%c0_1, %c0_2] : memref<256x8xf32, #tpu.memory_space<vmem>>, vector<256x8xf32>
    %cst = arith.constant dense<0.000000e+00> : vector<20x8xf32>
    %2 = tpu.matmul %0, %1, %cst {dimension_numbers = #tpu.dot_dimension_numbers<[1], [0], [0], [1], [0, 0, 1, 1], [], []>} : vector<20x256xf32>, vector<256x8xf32>, vector<20x8xf32> -> vector<20x8xf32>
    %c0_3 = arith.constant 0 : index
    %c0_4 = arith.constant 0 : index
    %3 = vector.load %arg3[%c0_3, %c0_4] : memref<1x1xf32, #tpu.memory_space<vmem>>, vector<1x1xf32>
    %4 = vector.broadcast %3 : vector<1x1xf32> to vector<20x8xf32>
    %5 = arith.addf %2, %4 : vector<20x8xf32>
    %cst_5 = arith.constant 0.000000e+00 : f32
    %6 = vector.broadcast %cst_5 : f32 to vector<20x8xf32>
    %7 = arith.maximumf %5, %6 : vector<20x8xf32>
    %8 = math.absf %5 : vector<20x8xf32>
    %cst_6 = arith.constant 0.000000e+00 : f32
    %9 = vector.broadcast %cst_6 : f32 to vector<20x8xf32>
    %10 = arith.subf %9, %8 : vector<20x8xf32>
    %11 = math.exp %10 : vector<20x8xf32>
    %cst_7 = arith.constant 1.000000e+00 : f32
    %12 = vector.broadcast %cst_7 : f32 to vector<20x8xf32>
    %13 = arith.addf %12, %11 : vector<20x8xf32>
    %14 = math.log %13 : vector<20x8xf32>
    %15 = arith.addf %7, %14 : vector<20x8xf32>
    %cst_8 = arith.constant 0.000000e+00 : f32
    %16 = vector.broadcast %cst_8 : f32 to vector<20x8xf32>
    %17 = arith.subf %16, %15 : vector<20x8xf32>
    %cst_9 = arith.constant dense<0xFF800000> : vector<20xf32>
    %18 = vector.multi_reduction <maximumf>, %17, %cst_9 [1] : vector<20x8xf32> to vector<20xf32>
    %19 = vector.shape_cast %18 : vector<20xf32> to vector<20x1xf32>
    %20 = vector.broadcast %19 : vector<20x1xf32> to vector<20x8xf32>
    %21 = arith.subf %17, %20 : vector<20x8xf32>
    %22 = math.exp %21 : vector<20x8xf32>
    %cst_10 = arith.constant dense<0.000000e+00> : vector<20xf32>
    %23 = vector.multi_reduction <add>, %22, %cst_10 [1] : vector<20x8xf32> to vector<20xf32>
    %24 = vector.shape_cast %23 : vector<20xf32> to vector<20x1xf32>
    %25 = math.log %24 : vector<20x1xf32>
    %26 = arith.addf %19, %25 : vector<20x1xf32>
    %27 = vector.broadcast %26 : vector<20x1xf32> to vector<20x8xf32>
    %28 = arith.subf %17, %27 : vector<20x8xf32>
    %c0_11 = arith.constant 0 : index
    %c0_12 = arith.constant 0 : index
    %29 = vector.load %arg4[%c0_11, %c0_12] : memref<20x8xf32, #tpu.memory_space<vmem>>, vector<20x8xf32>
    tpu.vector_store %arg4[%c0_11, %c0_12], %28 {strides = array<i32>} : memref<20x8xf32, #tpu.memory_space<vmem>>, vector<20x8xf32>,
    return
  }
  func.func @transform_0(%arg0: i32) -> (i32, i32) {
    %c0_i32 = arith.constant 0 : i32
    %c0_i32_0 = arith.constant 0 : i32
    return %arg0, %c0_i32 : i32, i32
  }
  func.func @transform_1(%arg0: i32) -> (i32, i32) {
    %c0_i32 = arith.constant 0 : i32
    %c0_i32_0 = arith.constant 0 : i32
    %c0_i32_1 = arith.constant 0 : i32
    return %c0_i32, %c0_i32_0 : i32, i32
  }
  func.func @transform_2(%arg0: i32) -> (i32, i32) {
    %c0_i32 = arith.constant 0 : i32
    %c0_i32_0 = arith.constant 0 : i32
    %c0_i32_1 = arith.constant 0 : i32
    return %c0_i32, %c0_i32_0 : i32, i32
  }
  func.func @transform_3(%arg0: i32) -> (i32, i32) {
    %c0_i32 = arith.constant 0 : i32
    %c0_i32_0 = arith.constant 0 : i32
    return %arg0, %c0_i32 : i32, i32
  }
}

</mosaic_0001>

<llo_original>
// kernel: tpu_custom_call.1
$region0: #{tpu_custom_call.1}
  #allocation0 [shape = 'u32[]', space=smem, size = 0x4, offset = 0x4, fixed_abs, tag = 'smem constant byte address 0x4 - core index']
  #allocation1 [shape = 'u32[72,128]{1,0:T(1,128)}', space=vmem, size = 0x9000, scoped, tag = 'internal scratch']
  #allocation2 [shape = 'f32[1,1]{1,0:T(1,128)S(1)}', space=vmem, size = 0x200, scoped, tag = 'scoped memory for tpu_custom_call.1']
  %s0 = inlined_call_operand.vmem [shape: f32[20,256], index: 0, kind: input, shape index: {}]
  %s1 = inlined_call_operand.vmem [shape: f32[256,8], index: 1, kind: input, shape index: {}]
  %s2 = inlined_call_operand.<no memory space> [shape: f32[1,1], index: 2, kind: input, shape index: {}]
  %s3 = inlined_call_operand.vmem [shape: f32[20,8], index: 3, kind: output, shape index: {}]
  %s4 = sld [smem:[#allocation0]]
  $region22: #{tpu_custom_call.1} parent=0
    _
  %s6 = ssub.s32 1, %s4
  %s7 = scalar_select 0, %s6, %s4
  %v8 = vstv %s2
  %9 = vst [vmem:[#allocation2] sm:$0x1] %v8
  // Predicated region
  $region2: #{tpu_custom_call.1} parent=0 // pred_check
    _
  $region3: #{tpu_custom_call.1} parent=0 // pred_check_branch
    %11 = sbr.rel (0) target = $region5
  $region4: #{tpu_custom_call.1} parent=0 // pred_region
    _
  $region5: #{tpu_custom_call.1} parent=0 // pred_fallthru
    _
  // Predicated region
  $region6: #{tpu_custom_call.1} parent=0 // pred_check
    _
  $region7: #{tpu_custom_call.1} parent=0 // pred_check_branch
    %13 = sbr.rel (0) target = $region9
  $region8: #{tpu_custom_call.1} parent=0 // pred_region
    _
  $region9: #{tpu_custom_call.1} parent=0 // pred_fallthru
    _
  // Predicated region
  $region10: #{tpu_custom_call.1} parent=0 // pred_check
    _
  $region11: #{tpu_custom_call.1} parent=0 // pred_check_branch
    %15 = sbr.rel (0) target = $region13
  $region12: #{tpu_custom_call.1} parent=0 // pred_region
    _
  $region13: #{tpu_custom_call.1} parent=0 // pred_fallthru
    _
  %v16 = vld [vmem:[%s0] sm:$0xff]
  %v17 = vld [vmem:[%s0 + $0x8] sm:$0xff]
  %v18 = vld [vmem:[%s0 + $0x10] sm:$0xff]
  %v19 = vld [vmem:[%s0 + $0x18] sm:$0xff]
  %v20 = vld [vmem:[%s0 + $0x20] sm:$0xf]
  %v21 = vld [vmem:[%s0 + $0x28] sm:$0xf]
  %v22 = vld [vmem:[%s1] sm:$0xff]
  %v23 = vld [vmem:[%s1 + $0x8] sm:$0xff]
  %v24 = vld [vmem:[%s1 + $0x10] sm:$0xff]
  %v25 = vld [vmem:[%s1 + $0x18] sm:$0xff]
  %v26 = vld [vmem:[%s1 + $0x20] sm:$0xff]
  %v27 = vld [vmem:[%s1 + $0x28] sm:$0xff]
  %v28 = vld [vmem:[%s1 + $0x30] sm:$0xff]
  %v29 = vld [vmem:[%s1 + $0x38] sm:$0xff]
  %v30 = vld [vmem:[%s1 + $0x40] sm:$0xff]
  %v31 = vld [vmem:[%s1 + $0x48] sm:$0xff]
  %v32 = vld [vmem:[%s1 + $0x50] sm:$0xff]
  %v33 = vld [vmem:[%s1 + $0x58] sm:$0xff]
  %v34 = vld [vmem:[%s1 + $0x60] sm:$0xff]
  %v35 = vld [vmem:[%s1 + $0x68] sm:$0xff]
  %v36 = vld [vmem:[%s1 + $0x70] sm:$0xff]
  %v37 = vld [vmem:[%s1 + $0x78] sm:$0xff]
  %v38 = vld [vmem:[%s1 + $0x80] sm:$0xff]
  %v39 = vld [vmem:[%s1 + $0x88] sm:$0xff]
  %v40 = vld [vmem:[%s1 + $0x90] sm:$0xff]
  %v41 = vld [vmem:[%s1 + $0x98] sm:$0xff]
  %v42 = vld [vmem:[%s1 + $0xa0] sm:$0xff]
  %v43 = vld [vmem:[%s1 + $0xa8] sm:$0xff]
  %v44 = vld [vmem:[%s1 + $0xb0] sm:$0xff]
  %v45 = vld [vmem:[%s1 + $0xb8] sm:$0xff]
  %v46 = vld [vmem:[%s1 + $0xc0] sm:$0xff]
  %v47 = vld [vmem:[%s1 + $0xc8] sm:$0xff]
  %v48 = vld [vmem:[%s1 + $0xd0] sm:$0xff]
  %v49 = vld [vmem:[%s1 + $0xd8] sm:$0xff]
  %v50 = vld [vmem:[%s1 + $0xe0] sm:$0xff]
  %v51 = vld [vmem:[%s1 + $0xe8] sm:$0xff]
  %v52 = vld [vmem:[%s1 + $0xf0] sm:$0xff]
  %v53 = vld [vmem:[%s1 + $0xf8] sm:$0xff]
  %v54 = vld [vmem:[#allocation2] sm:$0x1]
  %v56 = vperm.slane %v54, 0
  %57 = vset.pattern.permute.xlu0 0
  %58 = vperm.xlu0 %57, %v56
  %v59 = vpop.permute.xlu0 %58
  %61 = vmatpush.msra.mxu0 %v37
  %62 = vmatpush.msra.mxu0 %v36
  %63 = vmatpush.msra.mxu0 %v35
  %64 = vmatpush.msra.mxu0 %v34
  %65 = vmatpush.msra.mxu0 %v33
  %66 = vmatpush.msra.mxu0 %v32
  %67 = vmatpush.msra.mxu0 %v31
  %68 = vmatpush.msra.mxu0 %v30
  %69 = vmatpush.msra.mxu0 %v29
  %70 = vmatpush.msra.mxu0 %v28
  %71 = vmatpush.msra.mxu0 %v27
  %72 = vmatpush.msra.mxu0 %v26
  %73 = vmatpush.msra.mxu0 %v25
  %74 = vmatpush.msra.mxu0 %v24
  %75 = vmatpush.msra.mxu0 %v23
  %76 = vmatpush.msra.mxu0 %v22
  %77 = vmatmul.f32.gmra.mxu0 %v16
  %v78 = vpop.f32.mrf.mxu0
  %v79 = vadd.f32 %v59, %v78
  %80 = vmatmul.f32.gmra.mxu0 %v18
  %v81 = vpop.f32.mrf.mxu0
  %v82 = vadd.f32 %v59, %v81
  %83 = vmatmul.f32.gmra.mxu0 %v20
  %v84 = vpop.f32.mrf.mxu0
  %v85 = vadd.f32 %v59, %v84
  %86 = vdwg.mxu0
  %87 = vmatpush.msra.mxu0 %v53
  %88 = vmatpush.msra.mxu0 %v52
  %89 = vmatpush.msra.mxu0 %v51
  %90 = vmatpush.msra.mxu0 %v50
  %91 = vmatpush.msra.mxu0 %v49
  %92 = vmatpush.msra.mxu0 %v48
  %93 = vmatpush.msra.mxu0 %v47
  %94 = vmatpush.msra.mxu0 %v46
  %95 = vmatpush.msra.mxu0 %v45
  %96 = vmatpush.msra.mxu0 %v44
  %97 = vmatpush.msra.mxu0 %v43
  %98 = vmatpush.msra.mxu0 %v42
  %99 = vmatpush.msra.mxu0 %v41
  %100 = vmatpush.msra.mxu0 %v40
  %101 = vmatpush.msra.mxu0 %v39
  %102 = vmatpush.msra.mxu0 %v38
  %103 = vmatmul.f32.gmra.mxu0 %v17
  %v104 = vpop.f32.mrf.mxu0
  %v105 = vadd.f32 %v79, %v104
  %106 = vmatmul.f32.gmra.mxu0 %v19
  %v107 = vpop.f32.mrf.mxu0
  %v108 = vadd.f32 %v82, %v107
  %109 = vmatmul.f32.gmra.mxu0 %v21
  %v110 = vpop.f32.mrf.mxu0
  %v111 = vadd.f32 %v85, %v110
  %112 = vdwg.mxu0
  %v113 = vmax.f32 %v105, 0.0
  %v114 = vmax.f32 %v108, 0.0
  %v115 = vmax.f32 %v111, 0.0
  %v116 = vand.u32 2147483647, %v105
  %v117 = vand.u32 2147483647, %v108
  %v118 = vand.u32 2147483647, %v111
  %v119 = vsub.f32 0.0, %v116
  %v120 = vsub.f32 0.0, %v117
  %v121 = vsub.f32 0.0, %v118
  %v122 = vmul.f32 %v119, 1.442695
  %v123 = vpow.pop %v122
  %v124 = vmul.f32 %v120, 1.442695
  %v125 = vpow.pop %v124
  %v126 = vmul.f32 %v121, 1.442695
  %v127 = vpow.pop %v126
  %v128 = vadd.f32 %v123, 1.0
  %v129 = vadd.f32 %v125, 1.0
  %v130 = vadd.f32 %v127, 1.0
  %v131 = vlog2.pop %v128
  %v132 = vmul.f32 %v131, 0.6931472
  %v133 = vlog2.pop %v129
  %v134 = vmul.f32 %v133, 0.6931472
  %v135 = vlog2.pop %v130
  %v136 = vmul.f32 %v135, 0.6931472
  %v137 = vadd.f32 %v113, %v132
  %v138 = vadd.f32 %v114, %v134
  %v139 = vadd.f32 %v115, %v136
  %v140 = vsub.f32 0.0, %v137
  %v141 = vsub.f32 0.0, %v138
  %v142 = vsub.f32 0.0, %v139
  %vm143 = vcmask 64512
  %v144 = vsel %vm143, %v140, -inf
  %145 = vmax.xlane.f32.xlu0 %v144
  %v146 = vpop.xlane.xlu0 %145
  %v147 = vsel %vm143, %v141, -inf
  %148 = vmax.xlane.f32.xlu0 %v147
  %v149 = vpop.xlane.xlu0 %148
  %vm150 = vcmask 60416
  %v151 = vsel %vm150, %v142, -inf
  %152 = vmax.xlane.f32.xlu0 %v151
  %v153 = vpop.xlane.xlu0 %152
  %v154 = vsub.f32 %v140, %v146
  %v155 = vsub.f32 %v141, %v149
  %v156 = vsub.f32 %v142, %v153
  %v157 = vmul.f32 %v154, 1.442695
  %v158 = vpow.pop %v157
  %v159 = vmul.f32 %v155, 1.442695
  %v160 = vpow.pop %v159
  %v161 = vmul.f32 %v156, 1.442695
  %v162 = vpow.pop %v161
  %v163 = vsel %vm143, %v158, 0.0
  %164 = vadd.xlane.f32.xlu0 %v163
  %v165 = vpop.xlane.xlu0 %164
  %v166 = vsel %vm143, %v160, 0.0
  %167 = vadd.xlane.f32.xlu0 %v166
  %v168 = vpop.xlane.xlu0 %167
  %v169 = vsel %vm150, %v162, 0.0
  %170 = vadd.xlane.f32.xlu0 %v169
  %v171 = vpop.xlane.xlu0 %170
  %v172 = vlog2.pop %v165
  %v173 = vmul.f32 %v172, 0.6931472
  %v174 = vlog2.pop %v168
  %v175 = vmul.f32 %v174, 0.6931472
  %v176 = vlog2.pop %v171
  %v177 = vmul.f32 %v176, 0.6931472
  %v178 = vadd.f32 %v146, %v173
  %v179 = vadd.f32 %v149, %v175
  %v180 = vadd.f32 %v153, %v177
  %v181 = vsub.f32 %v140, %v178
  %v182 = vsub.f32 %v141, %v179
  %v183 = vsub.f32 %v142, %v180
  %184 = vst.msk [vmem:[%s3] sm:$0xff] %vm143, %v181
  %185 = vst.msk [vmem:[%s3 + $0x8] sm:$0xff] %vm143, %v182
  %186 = vst.msk [vmem:[%s3 + $0x10] sm:$0xf] %vm150, %v183
  // Predicated region
  $region14: #{tpu_custom_call.1} parent=0 // pred_check
    _
  $region15: #{tpu_custom_call.1} parent=0 // pred_check_branch
    %188 = sbr.rel (0) target = $region17
  $region16: #{tpu_custom_call.1} parent=0 // pred_region
    _
  $region17: #{tpu_custom_call.1} parent=0 // pred_fallthru
    _
  // Predicated region
  $region18: #{tpu_custom_call.1} parent=0 // pred_check
    _
  $region19: #{tpu_custom_call.1} parent=0 // pred_check_branch
    %190 = sbr.rel (0) target = $region21
  $region20: #{tpu_custom_call.1} parent=0 // pred_region
    _
  $region21: #{tpu_custom_call.1} parent=0 // pred_fallthru
    _

</llo_original>
